<compile_context>
chip_gen: v7x
topology: tpu7x:2x2x1
jax: 0.10.0
libtpu: 0.0.40
codegen_flags: <defaults>
</compile_context>

<pallas_src>
import functools

import jax
import jax.numpy as jnp
from jax import lax
from jax.experimental import pallas as pl
from jax.experimental.pallas import tpu as pltpu

_LANES = 128
_MAX_BLOCK_ROWS = 2048   # (2048, 128) f32 block = 1 MiB
_NUM_PARTIALS = 2        # leading "parallel" axis (v7x dual TensorCore)


def _focal_loss_kernel(x_ref, t_ref, out_ref, acc_ref, *,
                       alpha, gamma, n_valid, block_elems,
                       steps_per_partial, needs_mask):
    i = pl.program_id(0)              # partial-sum index ("parallel")
    j = pl.program_id(1)              # block index within this partial ("arbitrary")
    global_block = i * steps_per_partial + j

    @pl.when(j == 0)
    def _init():
        acc_ref[...] = jnp.zeros_like(acc_ref)

    # Cast in-kernel (inputs may arrive as bf16 logits / bool targets).
    x = x_ref[...].astype(jnp.float32)
    t = t_ref[...].astype(jnp.float32)

    # log(sigmoid(x)) = -softplus(-x); log(1 - sigmoid(x)) = -softplus(x).
    # Both softpluses share exp(-|x|): 2 EUP ops total here (exp, log1p).
    log1p_term = jnp.log1p(jnp.exp(-jnp.abs(x)))
    neg_log_p = jnp.maximum(-x, 0.0) + log1p_term     # -log(p)     = softplus(-x)
    neg_log_1mp = jnp.maximum(x, 0.0) + log1p_term    # -log(1 - p) = softplus(x)

    # F.binary_cross_entropy clamps each log term at -100 (-log at 100).
    neg_log_p = jnp.minimum(neg_log_p, 100.0)
    neg_log_1mp = jnp.minimum(neg_log_1mp, 100.0)
    bce = t * neg_log_p + (1.0 - t) * neg_log_1mp

    m = 1.0 - jnp.exp(-bce)
    if float(gamma) == 2.0:
        mod = m * m                   # avoid pow -> exp(gamma * log(m))
    elif float(gamma) == 1.0:
        mod = m
    else:
        mod = m ** gamma
    focal = alpha * mod * bce

    if needs_mask:
        # Only blocks at/after this index contain padding / out-of-range data.
        first_masked_block = n_valid // block_elems

        @pl.when(global_block < first_masked_block)
        def _acc_full():
            acc_ref[...] += focal

        @pl.when(global_block >= first_masked_block)
        def _acc_tail():
            base = global_block * block_elems
            rows_i = lax.broadcasted_iota(jnp.int32, focal.shape, 0)
            cols_i = lax.broadcasted_iota(jnp.int32, focal.shape, 1)
            idx = base + rows_i * focal.shape[1] + cols_i
            # where-select (not multiply) so OOB-row garbage cannot NaN-poison.
            acc_ref[...] += jnp.where(idx < n_valid, focal, 0.0)
    else:
        acc_ref[...] += focal

    @pl.when(j == steps_per_partial - 1)
    def _finalize():
        # Single cross-lane/sublane reduction per partial, epilogue only.
        out_ref[...] = jnp.zeros(out_ref.shape, jnp.float32) + jnp.sum(acc_ref[...])


def focal_loss(inputs, targets, alpha=0.8, gamma=2, smooth=1, *,
               max_block_rows=_MAX_BLOCK_ROWS):
    """Pallas TPU focal loss. `smooth` accepted for API parity (unused, as in
    the reference forward). Inputs are kept in their native dtypes."""
    del smooth  # unused by the reference implementation as well

    x = jnp.reshape(inputs, (-1,))
    t = jnp.reshape(targets, (-1,))
    n = int(x.shape[0])

    # Lane-dense (rows, 128) view; tiny pad only if n is not lane aligned.
    rows = pl.cdiv(n, _LANES)
    pad = rows * _LANES - n
    if pad:
        x = jnp.pad(x, (0, pad))
        t = jnp.pad(t, (0, pad))
    x2 = x.reshape(rows, _LANES)
    t2 = t.reshape(rows, _LANES)

    if rows <= max_block_rows:
        block_rows = rows                      # full-extent block (always legal)
    else:
        block_rows = max(8, (max_block_rows // 8) * 8)   # sublane aligned
    num_blocks = pl.cdiv(rows, block_rows)
    num_partials = _NUM_PARTIALS if num_blocks >= _NUM_PARTIALS else 1
    steps = pl.cdiv(num_blocks, num_partials)
    block_elems = block_rows * _LANES
    needs_mask = (num_partials * steps * block_elems) != n

    def in_map(i, j):
        # Clamp so steps past the last block re-read a valid block; their
        # contribution is zeroed by the in-kernel index mask.
        return (jnp.minimum(i * steps + j, num_blocks - 1), 0)

    kernel = functools.partial(
        _focal_loss_kernel,
        alpha=float(alpha), gamma=float(gamma),
        n_valid=n, block_elems=int(block_elems),
        steps_per_partial=int(steps), needs_mask=bool(needs_mask),
    )

    in_spec = pl.BlockSpec((block_rows, _LANES), in_map)
    out = pl.pallas_call(
        kernel,
        out_shape=jax.ShapeDtypeStruct((num_partials, 8, _LANES), jnp.float32),
        grid_spec=pltpu.PrefetchScalarGridSpec(
            num_scalar_prefetch=0,
            grid=(num_partials, steps),
            in_specs=[in_spec, in_spec],
            out_specs=pl.BlockSpec((1, 8, _LANES), lambda i, j: (i, 0, 0)),
            scratch_shapes=[pltpu.VMEM((block_rows, _LANES), jnp.float32)],
        ),
        compiler_params=pltpu.CompilerParams(
            dimension_semantics=("parallel", "arbitrary"),
        ),
    )(x2, t2)

    # Combine per-core partial sums; mean over the ORIGINAL element count.
    return jnp.sum(out[:, 0, 0]) * (1.0 / float(n))


def _focal_loss_ref(inputs, targets, alpha=0.8, gamma=2):
    """Pure-JAX reference mirroring the PyTorch module exactly."""
    p = jnp.clip(jax.nn.sigmoid(inputs.reshape(-1).astype(jnp.float32)), 0.0, 1.0)
    t = targets.reshape(-1).astype(jnp.float32)
    log_p = jnp.maximum(jnp.log(p), -100.0)
    log_1mp = jnp.maximum(jnp.log(1.0 - p), -100.0)
    bce = -(t * log_p + (1.0 - t) * log_1mp)
    focal = alpha * (1.0 - jnp.exp(-bce)) ** gamma * bce
    return jnp.mean(focal)


if __name__ == "__main__":
    key = jax.random.PRNGKey(0)
    k1, k2, k3, k4 = jax.random.split(key, 4)

    # --- main example: NCHW logits and binary targets (SAM mask logits vs GT)
    B, C, H, W = 2, 4, 16, 16
    logits = jax.random.normal(k1, (B, C, H, W), dtype=jnp.float32) * 2.0
    targets = (jax.random.uniform(k2, (B, C, H, W)) > 0.5).astype(jnp.float32)

    loss = focal_loss(logits, targets, alpha=0.8, gamma=2, smooth=1)
    loss = jax.block_until_ready(loss)
    ref = _focal_loss_ref(logits, targets, alpha=0.8, gamma=2)
    assert jnp.allclose(loss, ref, rtol=1e-5, atol=1e-6), (loss, ref)

    # --- coverage test: odd size exercising lane pad, multi-block grid, the
    # two-partial "parallel" axis, tail masking, and the clamped extra step.
    shp = (2, 4, 36, 29)   # 8352 elements (not a multiple of 128)
    logits2 = jax.random.normal(k3, shp, dtype=jnp.float32) * 3.0
    targets2 = (jax.random.uniform(k4, shp) > 0.5).astype(jnp.float32)

    loss2 = focal_loss(logits2, targets2, alpha=0.8, gamma=2, smooth=1,
                       max_block_rows=16)
    loss2 = jax.block_until_ready(loss2)
    ref2 = _focal_loss_ref(logits2, targets2, alpha=0.8, gamma=2)
    assert jnp.allclose(loss2, ref2, rtol=1e-5, atol=1e-6), (loss2, ref2)

    print("KERNEL_OK")
</pallas_src>

<mosaic_0001>
module attributes {stable_mosaic.version = 11 : i64} {
  func.func @_focal_loss_kernel(%arg0: i32, %arg1: i32, %arg2: memref<16x128xf32, #tpu.memory_space<vmem>>, %arg3: memref<16x128xf32, #tpu.memory_space<vmem>>, %arg4: memref<1x8x128xf32, #tpu.memory_space<vmem>>, %arg5: memref<16x128xf32, #tpu.memory_space<vmem>>) attributes {dimension_semantics = [#tpu.dimension_semantics<parallel>, #tpu.dimension_semantics<arbitrary>], iteration_bounds = array<i64: 1, 1>, scalar_prefetch = 0 : i64, scratch_operands = 1 : i64, tpu.core_type = #tpu.core_type<tc>, window_params = [{transform_indices = @transform_0, window_bounds = array<i64: 16, 128>}, {transform_indices = @transform_1, window_bounds = array<i64: 16, 128>}, {transform_indices = @transform_2, window_bounds = array<i64: 1, 8, 128>}]} {
    %c0_i32 = arith.constant 0 : i32
    %0 = arith.cmpi eq, %arg1, %c0_i32 : i32
    %1 = arith.extui %0 : i1 to i32
    %c0_i32_0 = arith.constant 0 : i32
    %2 = arith.cmpi ne, %1, %c0_i32_0 : i32
    scf.if %2 {
      %cst_19 = arith.constant 0.000000e+00 : f32
      %42 = vector.broadcast %cst_19 : f32 to vector<16x128xf32>
      %c0_20 = arith.constant 0 : index
      %c0_21 = arith.constant 0 : index
      %43 = vector.load %arg5[%c0_20, %c0_21] : memref<16x128xf32, #tpu.memory_space<vmem>>, vector<16x128xf32>
      tpu.vector_store %arg5[%c0_20, %c0_21], %42 {strides = array<i32>} : memref<16x128xf32, #tpu.memory_space<vmem>>, vector<16x128xf32>,
    } else {
    }
    %c0 = arith.constant 0 : index
    %c0_1 = arith.constant 0 : index
    %3 = vector.load %arg2[%c0, %c0_1] : memref<16x128xf32, #tpu.memory_space<vmem>>, vector<16x128xf32>
    %c0_2 = arith.constant 0 : index
    %c0_3 = arith.constant 0 : index
    %4 = vector.load %arg3[%c0_2, %c0_3] : memref<16x128xf32, #tpu.memory_space<vmem>>, vector<16x128xf32>
    %5 = math.absf %3 : vector<16x128xf32>
    %cst = arith.constant 0.000000e+00 : f32
    %6 = vector.broadcast %cst : f32 to vector<16x128xf32>
    %7 = arith.subf %6, %5 : vector<16x128xf32>
    %8 = math.exp %7 : vector<16x128xf32>
    %9 = math.log1p %8 : vector<16x128xf32>
    %cst_4 = arith.constant 0.000000e+00 : f32
    %10 = vector.broadcast %cst_4 : f32 to vector<16x128xf32>
    %11 = arith.subf %10, %3 : vector<16x128xf32>
    %cst_5 = arith.constant 0.000000e+00 : f32
    %12 = vector.broadcast %cst_5 : f32 to vector<16x128xf32>
    %13 = arith.maximumf %11, %12 : vector<16x128xf32>
    %14 = arith.addf %13, %9 : vector<16x128xf32>
    %cst_6 = arith.constant 0.000000e+00 : f32
    %15 = vector.broadcast %cst_6 : f32 to vector<16x128xf32>
    %16 = arith.maximumf %3, %15 : vector<16x128xf32>
    %17 = arith.addf %16, %9 : vector<16x128xf32>
    %cst_7 = arith.constant 1.000000e+02 : f32
    %18 = vector.broadcast %cst_7 : f32 to vector<16x128xf32>
    %19 = arith.minimumf %14, %18 : vector<16x128xf32>
    %cst_8 = arith.constant 1.000000e+02 : f32
    %20 = vector.broadcast %cst_8 : f32 to vector<16x128xf32>
    %21 = arith.minimumf %17, %20 : vector<16x128xf32>
    %22 = arith.mulf %4, %19 : vector<16x128xf32>
    %cst_9 = arith.constant 1.000000e+00 : f32
    %23 = vector.broadcast %cst_9 : f32 to vector<16x128xf32>
    %24 = arith.subf %23, %4 : vector<16x128xf32>
    %25 = arith.mulf %24, %21 : vector<16x128xf32>
    %26 = arith.addf %22, %25 : vector<16x128xf32>
    %cst_10 = arith.constant 0.000000e+00 : f32
    %27 = vector.broadcast %cst_10 : f32 to vector<16x128xf32>
    %28 = arith.subf %27, %26 : vector<16x128xf32>
    %29 = math.exp %28 : vector<16x128xf32>
    %cst_11 = arith.constant 1.000000e+00 : f32
    %30 = vector.broadcast %cst_11 : f32 to vector<16x128xf32>
    %31 = arith.subf %30, %29 : vector<16x128xf32>
    %32 = arith.mulf %31, %31 : vector<16x128xf32>
    %cst_12 = arith.constant 8.000000e-01 : f32
    %33 = vector.broadcast %cst_12 : f32 to vector<16x128xf32>
    %34 = arith.mulf %33, %32 : vector<16x128xf32>
    %35 = arith.mulf %34, %26 : vector<16x128xf32>
    %c0_13 = arith.constant 0 : index
    %c0_14 = arith.constant 0 : index
    %36 = vector.load %arg5[%c0_13, %c0_14] : memref<16x128xf32, #tpu.memory_space<vmem>>, vector<16x128xf32>
    %37 = arith.addf %36, %35 : vector<16x128xf32>
    %c0_15 = arith.constant 0 : index
    %c0_16 = arith.constant 0 : index
    %38 = vector.load %arg5[%c0_15, %c0_16] : memref<16x128xf32, #tpu.memory_space<vmem>>, vector<16x128xf32>
    tpu.vector_store %arg5[%c0_15, %c0_16], %37 {strides = array<i32>} : memref<16x128xf32, #tpu.memory_space<vmem>>, vector<16x128xf32>,
    %c0_i32_17 = arith.constant 0 : i32
    %39 = arith.cmpi eq, %arg1, %c0_i32_17 : i32
    %40 = arith.extui %39 : i1 to i32
    %c0_i32_18 = arith.constant 0 : i32
    %41 = arith.cmpi ne, %40, %c0_i32_18 : i32
    scf.if %41 {
      %cst_19 = arith.constant 0.000000e+00 : f32
      %42 = vector.broadcast %cst_19 : f32 to vector<1x8x128xf32>
      %c0_20 = arith.constant 0 : index
      %c0_21 = arith.constant 0 : index
      %43 = vector.load %arg5[%c0_20, %c0_21] : memref<16x128xf32, #tpu.memory_space<vmem>>, vector<16x128xf32>
      %44 = vector.shape_cast %43 : vector<16x128xf32> to vector<1x16x128xf32>
      %cst_22 = arith.constant dense<0.000000e+00> : vector<1xf32>
      %45 = vector.multi_reduction <add>, %44, %cst_22 [1, 2] : vector<1x16x128xf32> to vector<1xf32>
      %46 = vector.shape_cast %45 : vector<1xf32> to vector<1x1x1xf32>
      %47 = vector.extract %46[0, 0, 0] : f32 from vector<1x1x1xf32>
      %48 = vector.broadcast %47 : f32 to vector<1x8x128xf32>
      %49 = arith.addf %42, %48 : vector<1x8x128xf32>
      %c0_23 = arith.constant 0 : index
      %c0_24 = arith.constant 0 : index
      %c0_25 = arith.constant 0 : index
      %50 = vector.load %arg4[%c0_23, %c0_24, %c0_25] : memref<1x8x128xf32, #tpu.memory_space<vmem>>, vector<1x8x128xf32>
      tpu.vector_store %arg4[%c0_23, %c0_24, %c0_25], %49 {strides = array<i32>} : memref<1x8x128xf32, #tpu.memory_space<vmem>>, vector<1x8x128xf32>,
    } else {
    }
    return
  }
  func.func @transform_0(%arg0: i32, %arg1: i32) -> (i32, i32) {
    %c1_i32 = arith.constant 1 : i32
    %0 = arith.muli %arg0, %c1_i32 : i32
    %1 = arith.addi %0, %arg1 : i32
    %c0_i32 = arith.constant 0 : i32
    %2 = arith.minsi %1, %c0_i32 : i32
    %c0_i32_0 = arith.constant 0 : i32
    %c0_i32_1 = arith.constant 0 : i32
    return %2, %c0_i32_0 : i32, i32
  }
  func.func @transform_1(%arg0: i32, %arg1: i32) -> (i32, i32) {
    %c1_i32 = arith.constant 1 : i32
    %0 = arith.muli %arg0, %c1_i32 : i32
    %1 = arith.addi %0, %arg1 : i32
    %c0_i32 = arith.constant 0 : i32
    %2 = arith.minsi %1, %c0_i32 : i32
    %c0_i32_0 = arith.constant 0 : i32
    %c0_i32_1 = arith.constant 0 : i32
    return %2, %c0_i32_0 : i32, i32
  }
  func.func @transform_2(%arg0: i32, %arg1: i32) -> (i32, i32, i32) {
    %c0_i32 = arith.constant 0 : i32
    %c0_i32_0 = arith.constant 0 : i32
    %c0_i32_1 = arith.constant 0 : i32
    return %arg0, %c0_i32, %c0_i32_0 : i32, i32, i32
  }
}

</mosaic_0001>

<llo_original>
// kernel: tpu_custom_call.1
$region0: #{tpu_custom_call.1}
  #allocation0 [shape = 'u32[]', space=smem, size = 0x4, offset = 0x4, fixed_abs, tag = 'smem constant byte address 0x4 - core index']
  #allocation1 [shape = 'u32[144,128]{1,0:T(1,128)}', space=vmem, size = 0x12000, scoped, tag = 'internal scratch']
  #allocation2 [shape = 'f32[16,128]{1,0:T(8,128)}', space=vmem, size = 0x2000, scoped, tag = 'scratch operand']
  %s0 = inlined_call_operand.hbm [shape: f32[16,128], index: 0, kind: input, shape index: {}]
  %s1 = inlined_call_operand.hbm [shape: f32[16,128], index: 1, kind: input, shape index: {}]
  %s2 = inlined_call_operand.hbm [shape: f32[1,8,128], index: 2, kind: output, shape index: {}]
  %s3 = sld [smem:[#allocation0]]
  $region34: #{tpu_custom_call.1} parent=0
    _
  %s5 = ssub.s32 1, %s3
  %s6 = scalar_select 0, %s5, %s3
  $region1: #{tpu_custom_call.1} parent=0
    #allocation3 [shape = 'u8[8192]{0}', space=vmem, size = 0x2000, scoped, tag = 'input window, operand 0, single buffered']
    #allocation4 [shape = 's32[1]{0}', space=sflag, size = 0x4, scoped, tag = 'scoped memory for tpu_custom_call.1']
    #allocation5 [shape = 's32[1]{0}', space=sflag, size = 0x4, scoped, tag = 'scoped memory for tpu_custom_call.1']
    #allocation6 [shape = 'u8[8192]{0}', space=vmem, size = 0x2000, scoped, tag = 'input window, operand 1, single buffered']
    #allocation7 [shape = 's32[1]{0}', space=sflag, size = 0x4, scoped, tag = 'scoped memory for tpu_custom_call.1']
    #allocation8 [shape = 'u8[4096]{0}', space=vmem, size = 0x1000, scoped, tag = 'output window, operand 0, single buffered']
    %7 = vsyncpa [#allocation4], 0
    %8 = vsyncpa [#allocation7], 0
    %9 = vsyncpa [#allocation5], 0
    // Predicated region
    $region2: #{tpu_custom_call.1} parent=1 // pred_check
      _
    $region3: #{tpu_custom_call.1} parent=1 // pred_check_branch
      %11 = sbr.rel (0) target = $region5
    $region4: #{tpu_custom_call.1} parent=1 // pred_region
      %s12 = sadd.s32 0, 0
      %p13 = scmp.lt.s32.totalorder %s12, 0
      %s14 = scalar_select %p13, %s12, 0
      %s15 = smul.u32 2, %s14
      %s17 = ssub.s32 256, 256
      %18 = vsyncadd [#allocation4], %s17
      %s19 = smul.addr %s15, 128
      %s20 = scalar_lea.hbm %s0, %s19
      %s21 = sshll.u32 [#allocation3], 4
      %s22 = int_to_ptr.vmem [resolvable:$true] %s21
      %27 = dma.hbm_to_vmem [thread:$0]  %s20, 256, %s22, [#allocation4], 128, 128, 8
    $region5: #{tpu_custom_call.1} parent=1 // pred_fallthru
      _
    // Predicated region
    $region6: #{tpu_custom_call.1} parent=1 // pred_check
      _
    $region7: #{tpu_custom_call.1} parent=1 // pred_check_branch
      %29 = sbr.rel (0) target = $region9
    $region8: #{tpu_custom_call.1} parent=1 // pred_region
      %s30 = sadd.s32 0, 0
      %p31 = scmp.lt.s32.totalorder %s30, 0
      %s32 = scalar_select %p31, %s30, 0
      %s33 = smul.u32 2, %s32
      %s35 = ssub.s32 256, 256
      %36 = vsyncadd [#allocation7], %s35
      %s37 = smul.addr %s33, 128
      %s38 = scalar_lea.hbm %s1, %s37
      %s39 = sshll.u32 [#allocation6], 4
      %s40 = int_to_ptr.vmem [resolvable:$true] %s39
      %45 = dma.hbm_to_vmem [thread:$0]  %s38, 256, %s40, [#allocation7], 128, 128, 8
    $region9: #{tpu_custom_call.1} parent=1 // pred_fallthru
      _
    // Predicated region
    $region10: #{tpu_custom_call.1} parent=1 // pred_check
      _
    $region11: #{tpu_custom_call.1} parent=1 // pred_check_branch
      %47 = sbr.rel (0) target = $region13
    $region12: #{tpu_custom_call.1} parent=1 // pred_region
      %48 = dma.done [#allocation4], 256
    $region13: #{tpu_custom_call.1} parent=1 // pred_fallthru
      _
    // Predicated region
    $region14: #{tpu_custom_call.1} parent=1 // pred_check
      _
    $region15: #{tpu_custom_call.1} parent=1 // pred_check_branch
      %50 = sbr.rel (0) target = $region17
    $region16: #{tpu_custom_call.1} parent=1 // pred_region
      %51 = dma.done [#allocation7], 256
    $region17: #{tpu_custom_call.1} parent=1 // pred_fallthru
      _
    %s52 = sadd.s32 0, 0
    %p53 = scmp.lt.s32.totalorder %s52, 0
    %s54 = scalar_select %p53, %s52, 0
    %s55 = smul.u32 2, %s54
    %s56 = sadd.s32 0, 0
    %p57 = scmp.lt.s32.totalorder %s56, 0
    %s58 = scalar_select %p57, %s56, 0
    %s59 = smul.u32 2, %s58
    %p60 = scmp.eq.s32.totalorder 0, 0
    // Predicated region
    $region18: #{tpu_custom_call.1} parent=1 // pred_check
      %p61 = pneg %p60
    $region19: #{tpu_custom_call.1} parent=1 // pred_check_branch
      %63 = sbr.rel (%p61) target = $region21
    $region20: #{tpu_custom_call.1} parent=1 // pred_region
      %64 = vst [vmem:[#allocation2] sm:$0xff] 0.0
      %65 = vst [vmem:[#allocation2 + $0x8] sm:$0xff] 0.0
    $region21: #{tpu_custom_call.1} parent=1 // pred_fallthru
      _
    %v66 = vld [vmem:[#allocation3] sm:$0xff]
    %v67 = vld [vmem:[#allocation3 + $0x8] sm:$0xff]
    %v68 = vld [vmem:[#allocation6] sm:$0xff]
    %v69 = vld [vmem:[#allocation6 + $0x8] sm:$0xff]
    %v70 = vand.u32 2147483647, %v66
    %v71 = vand.u32 2147483647, %v67
    %v72 = vsub.f32 0.0, %v70
    %v73 = vsub.f32 0.0, %v71
    %v74 = vmul.f32 %v72, 1.442695
    %v75 = vpow.pop %v74
    %v76 = vmul.f32 %v73, 1.442695
    %v77 = vpow.pop %v76
    %v78 = vadd.f32 %v75, 1.0
    %v79 = vlog2.pop %v78
    %v80 = vmul.f32 %v79, 0.6931472
    %v81 = vmul.f32 -0.5, %v75
    %v82 = vadd.f32 %v81, 1.0
    %v83 = vmul.f32 %v82, %v75
    %v84 = vand.u32 2147483647, %v75
    %vm85 = vcmp.lt.f32.partialorder %v84, 0.0004427343
    %v86 = vsel %vm85, %v83, %v80
    %v87 = vadd.f32 %v77, 1.0
    %v88 = vlog2.pop %v87
    %v89 = vmul.f32 %v88, 0.6931472
    %v90 = vmul.f32 -0.5, %v77
    %v91 = vadd.f32 %v90, 1.0
    %v92 = vmul.f32 %v91, %v77
    %v93 = vand.u32 2147483647, %v77
    %vm94 = vcmp.lt.f32.partialorder %v93, 0.0004427343
    %v95 = vsel %vm94, %v92, %v89
    %v96 = vsub.f32 0.0, %v66
    %v97 = vsub.f32 0.0, %v67
    %v98 = vmax.f32 %v96, 0.0
    %v99 = vmax.f32 %v97, 0.0
    %v100 = vadd.f32 %v98, %v86
    %v101 = vadd.f32 %v99, %v95
    %v102 = vmax.f32 %v66, 0.0
    %v103 = vmax.f32 %v67, 0.0
    %v104 = vadd.f32 %v102, %v86
    %v105 = vadd.f32 %v103, %v95
    %v106 = vmin.f32 %v100, 100.0
    %v107 = vmin.f32 %v101, 100.0
    %v108 = vmin.f32 %v104, 100.0
    %v109 = vmin.f32 %v105, 100.0
    %v110 = vmul.f32 %v68, %v106
    %v111 = vmul.f32 %v69, %v107
    %v112 = vsub.f32 1.0, %v68
    %v113 = vsub.f32 1.0, %v69
    %v114 = vmul.f32 %v112, %v108
    %v115 = vmul.f32 %v113, %v109
    %v116 = vadd.f32 %v110, %v114
    %v117 = vadd.f32 %v111, %v115
    %v118 = vsub.f32 0.0, %v116
    %v119 = vsub.f32 0.0, %v117
    %v120 = vmul.f32 %v118, 1.442695
    %v121 = vpow.pop %v120
    %v122 = vmul.f32 %v119, 1.442695
    %v123 = vpow.pop %v122
    %v124 = vsub.f32 1.0, %v121
    %v125 = vsub.f32 1.0, %v123
    %v126 = vmul.f32 %v124, %v124
    %v127 = vmul.f32 %v125, %v125
    %v128 = vmul.f32 %v126, 0.8
    %v129 = vmul.f32 %v127, 0.8
    %v130 = vmul.f32 %v128, %v116
    %v131 = vmul.f32 %v129, %v117
    %v132 = vld [vmem:[#allocation2] sm:$0xff]
    %v133 = vld [vmem:[#allocation2 + $0x8] sm:$0xff]
    %v134 = vadd.f32 %v132, %v130
    %v135 = vadd.f32 %v133, %v131
    %136 = vst [vmem:[#allocation2] sm:$0xff] %v134
    %137 = vst [vmem:[#allocation2 + $0x8] sm:$0xff] %v135
    // Predicated region
    $region22: #{tpu_custom_call.1} parent=1 // pred_check
      %p138 = pneg %p60
    $region23: #{tpu_custom_call.1} parent=1 // pred_check_branch
      %140 = sbr.rel (%p138) target = $region25
    $region24: #{tpu_custom_call.1} parent=1 // pred_region
      %v141 = vld [vmem:[#allocation2] sm:$0xff]
      %v142 = vld [vmem:[#allocation2 + $0x8] sm:$0xff]
      %v143 = vadd.f32 %v141, %v142
      %144 = vadd.xlane.f32.xlu0 %v143
      %v145 = vpop.xlane.xlu0 %144
      %v146 = vrot.slane %v145, 4
      %v147 = vadd.f32 %v145, %v146
      %v148 = vrot.slane %v147, 2
      %v149 = vadd.f32 %v147, %v148
      %v150 = vrot.slane %v149, 1
      %v151 = vadd.f32 %v149, %v150
      %s152 = vtos %v151
      %v153 = vstv %s152
      %v154 = vadd.f32 %v153, 0.0
      %155 = vst [vmem:[#allocation8] sm:$0xff] %v154
    $region25: #{tpu_custom_call.1} parent=1 // pred_fallthru
      _
    // Predicated region
    $region26: #{tpu_custom_call.1} parent=1 // pred_check
      _
    $region27: #{tpu_custom_call.1} parent=1 // pred_check_branch
      %157 = sbr.rel (0) target = $region29
    $region28: #{tpu_custom_call.1} parent=1 // pred_region
      %s159 = ssub.s32 128, 128
      %160 = vsyncadd [#allocation5], %s159
      %s162 = sshll.u32 [#allocation8], 4
      %s163 = int_to_ptr.vmem [resolvable:$true] %s162
      %165 = dma.vmem_to_hbm [thread:$0]  %s163, 128, %s2, [#allocation5]
    $region29: #{tpu_custom_call.1} parent=1 // pred_fallthru
      _
    // Predicated region
    $region30: #{tpu_custom_call.1} parent=1 // pred_check
      _
    $region31: #{tpu_custom_call.1} parent=1 // pred_check_branch
      %167 = sbr.rel (0) target = $region33
    $region32: #{tpu_custom_call.1} parent=1 // pred_region
      %168 = dma.done [#allocation5], 128
    $region33: #{tpu_custom_call.1} parent=1 // pred_fallthru
      _
    %169 = vsyncpa [#allocation4], 1
    %170 = vsyncpa [#allocation7], 1
    %171 = vsyncpa [#allocation5], 1

</llo_original>
